<compile_context>
chip_gen: v5e
topology: v5e:2x2
jax: 0.10.0
libtpu: 0.0.40
codegen_flags: <defaults>
</compile_context>

<pallas_src>
import functools

import jax
import jax.numpy as jnp
from jax.experimental import pallas as pl
from jax.experimental.pallas import tpu as pltpu

LANES = 128
SUBLANES = 8
PAD = LANES * SUBLANES  # pad the hour axis to a multiple of 1024 (safe & trivial)


def totex_batched_kernel(scalars_ref, slab_ref, out_ref):
    """Batched TOTEX evaluation; presets resident in VMEM, scenarios in SMEM.

    scalars_ref (SMEM, f32[6*B]): per scenario b (flat, stride 6):
        [cost_pv, cost_bat, cost_buy, dem_tot, cap_pv, cap_bat]
    slab_ref    (VMEM, f32[2, rows, 128]): [availability_pv ; demand_values]
        zero-padded, lane-dense (padded entries contribute exactly 0).
    out_ref     (SMEM, f32[B]): TOTEX per scenario.
    """
    avail = slab_ref[0]   # (rows, 128)
    dem = slab_ref[1]     # (rows, 128)

    B = out_ref.shape[0]
    for b in range(B):            # B is small & static -> fully unrolled
        base = b * 6
        cost_pv = scalars_ref[base + 0]
        cost_bat = scalars_ref[base + 1]
        cost_buy = scalars_ref[base + 2]
        dem_tot = scalars_ref[base + 3]
        cap_pv = scalars_ref[base + 4]
        cap_bat = scalars_ref[base + 5]

        # EnergyBuy[i] = Demand[i] - min(CAP_PV*avail[i], Demand[i])
        #             = max(dem_tot*dem[i] - cap_pv*avail[i], 0)   (battery idle)
        energy_buy = jnp.maximum(dem_tot * dem - cap_pv * avail, 0.0)

        # objective: cost_pv*CAP_PV + cost_buy*sum(EnergyBuy) + cost_bat*CAP_BAT
        out_ref[b] = (cost_pv * cap_pv
                      + cost_buy * jnp.sum(energy_buy)
                      + cost_bat * cap_bat)


def make_preset_slab(availability_pv, demand_values):
    """One-time preprocessing of the fixed preset data (CSV equivalents).

    Returns a single f32[2, rows, 128] device array: slab[0] = availability_pv,
    slab[1] = demand_values, hour axis zero-padded to a multiple of 1024 and
    reshaped lane-dense.  Call once; reuse for every kernel launch.
    """
    h = availability_pv.shape[0]
    h_pad = ((h + PAD - 1) // PAD) * PAD
    rows = h_pad // LANES

    def to_slab(x):
        x = jnp.asarray(x, dtype=jnp.float32)
        x = jnp.pad(x, (0, h_pad - h))          # zero-pad -> zero contribution
        return x.reshape(rows, LANES)

    return jnp.stack([to_slab(availability_pv), to_slab(demand_values)], axis=0)


def pack_scenarios(inputs_batch, caps_batch):
    """Build the flat f32[6*B] scenario vector once (outside the hot path).

    inputs_batch: f32[B, 4] = [cost_pv, cost_bat, cost_buy, dem_tot] per row.
    caps_batch:   f32[B, 2] = [cap_pv, cap_bat] per row.
    """
    inputs_batch = jnp.asarray(inputs_batch, dtype=jnp.float32).reshape(-1, 4)
    caps_batch = jnp.asarray(caps_batch, dtype=jnp.float32).reshape(-1, 2)
    return jnp.concatenate([inputs_batch, caps_batch], axis=1).reshape(-1)


@jax.jit
def plexplain_totex_batched(scenarios_flat, preset_slab):
    """scenarios_flat: f32[6*B]; preset_slab: f32[2, rows, 128]. Returns f32[B]."""
    B = scenarios_flat.shape[0] // 6
    return pl.pallas_call(
        totex_batched_kernel,
        out_shape=jax.ShapeDtypeStruct((B,), jnp.float32),
        in_specs=[
            pl.BlockSpec(memory_space=pltpu.MemorySpace.SMEM),   # scenarios
            pl.BlockSpec(memory_space=pltpu.MemorySpace.VMEM),   # preset slab
        ],
        out_specs=pl.BlockSpec(memory_space=pltpu.MemorySpace.SMEM),
    )(scenarios_flat, preset_slab)


def plexplain_totex_ref(inputs, availability_pv, demand_values,
                        cap_pv=0.0, cap_bat=0.0):
    """Pure-JAX reference of the feasible-point TOTEX evaluation."""
    demand = inputs[3] * demand_values
    energy_pv = jnp.minimum(cap_pv * availability_pv, demand)
    energy_buy = demand - energy_pv
    return (inputs[0] * cap_pv + inputs[2] * jnp.sum(energy_buy)
            + inputs[1] * cap_bat)


if __name__ == "__main__":
    key = jax.random.PRNGKey(0)
    k1, k2 = jax.random.split(key, 2)

    # Real PlexPlain horizon (non-power-of-two; exercised via zero-padding).
    H = 8760

    # inputs = [cost_pv, cost_bat, cost_buy, dem_tot]  (positive, deterministic)
    inputs = jax.random.uniform(k1, (4,), dtype=jnp.float32,
                                minval=0.5, maxval=2.0)
    inputs = inputs.at[3].set(3500.0)  # total annual demand, like the real model

    # Synthetic deterministic preset data (replaces PVavail.csv / demand.csv):
    t = jnp.arange(H, dtype=jnp.float32)
    availability_pv = jnp.clip(jnp.sin(2.0 * jnp.pi * t / 24.0), 0.0, 1.0)
    demand_raw = 1.0 + 0.5 * jax.random.uniform(k2, (H,), dtype=jnp.float32)
    demand_values = demand_raw / jnp.sum(demand_raw)  # percentage split, sums to 1

    # One-time preset preprocessing (reused across all launches).
    preset_slab = make_preset_slab(availability_pv, demand_values)

    # ---- Batched scenario sweep: B = 3 (cap_pv, cap_bat) capacity options ----
    caps = jnp.array([[0.0, 0.0],     # grid-only feasible point
                      [5.0, 2.0],     # exercises the PV-clipping path
                      [12.5, 7.5]],   # larger capacities
                     dtype=jnp.float32)
    inputs_batch = jnp.tile(inputs[None, :], (caps.shape[0], 1))
    scenarios = pack_scenarios(inputs_batch, caps)        # f32[18], built once

    out = jax.block_until_ready(plexplain_totex_batched(scenarios, preset_slab))
    assert out.shape == (caps.shape[0],)

    for b in range(caps.shape[0]):
        ref = plexplain_totex_ref(inputs, availability_pv, demand_values,
                                  cap_pv=float(caps[b, 0]),
                                  cap_bat=float(caps[b, 1]))
        assert jnp.allclose(out[b], ref, rtol=1e-5, atol=1e-4), (b, out[b], ref)

    # ---- Single-scenario (B = 1) path through the same kernel ----
    scenario_single = pack_scenarios(inputs[None, :],
                                     jnp.array([[5.0, 2.0]], dtype=jnp.float32))
    out1 = jax.block_until_ready(
        plexplain_totex_batched(scenario_single, preset_slab))
    ref1 = plexplain_totex_ref(inputs, availability_pv, demand_values,
                               cap_pv=5.0, cap_bat=2.0)
    assert out1.shape == (1,)
    assert jnp.allclose(out1[0], ref1, rtol=1e-5, atol=1e-4), (out1, ref1)

    print("KERNEL_OK")
</pallas_src>

<mosaic_0001>
module attributes {stable_mosaic.version = 11 : i64} {
  func.func @totex_batched_kernel(%arg0: memref<18xf32, #tpu.memory_space<smem>>, %arg1: memref<2x72x128xf32, #tpu.memory_space<vmem>>, %arg2: memref<3xf32, #tpu.memory_space<smem>>) attributes {dimension_semantics = [], scalar_prefetch = 0 : i64, scratch_operands = 0 : i64, tpu.core_type = #tpu.core_type<tc>} {
    %c0 = arith.constant 0 : index
    %c0_0 = arith.constant 0 : index
    %c0_1 = arith.constant 0 : index
    %0 = vector.load %arg1[%c0, %c0_0, %c0_1] : memref<2x72x128xf32, #tpu.memory_space<vmem>>, vector<1x72x128xf32>
    %1 = vector.shape_cast %0 : vector<1x72x128xf32> to vector<72x128xf32>
    %c1 = arith.constant 1 : index
    %c0_2 = arith.constant 0 : index
    %c0_3 = arith.constant 0 : index
    %2 = vector.load %arg1[%c1, %c0_2, %c0_3] : memref<2x72x128xf32, #tpu.memory_space<vmem>>, vector<1x72x128xf32>
    %3 = vector.shape_cast %2 : vector<1x72x128xf32> to vector<72x128xf32>
    %c0_4 = arith.constant 0 : index
    %4 = memref.load %arg0[%c0_4] : memref<18xf32, #tpu.memory_space<smem>>
    %c1_5 = arith.constant 1 : index
    %5 = memref.load %arg0[%c1_5] : memref<18xf32, #tpu.memory_space<smem>>
    %c2 = arith.constant 2 : index
    %6 = memref.load %arg0[%c2] : memref<18xf32, #tpu.memory_space<smem>>
    %c3 = arith.constant 3 : index
    %7 = memref.load %arg0[%c3] : memref<18xf32, #tpu.memory_space<smem>>
    %c4 = arith.constant 4 : index
    %8 = memref.load %arg0[%c4] : memref<18xf32, #tpu.memory_space<smem>>
    %c5 = arith.constant 5 : index
    %9 = memref.load %arg0[%c5] : memref<18xf32, #tpu.memory_space<smem>>
    %10 = vector.broadcast %7 : f32 to vector<72x128xf32>
    %11 = arith.mulf %10, %3 : vector<72x128xf32>
    %12 = vector.broadcast %8 : f32 to vector<72x128xf32>
    %13 = arith.mulf %12, %1 : vector<72x128xf32>
    %14 = arith.subf %11, %13 : vector<72x128xf32>
    %cst = arith.constant 0.000000e+00 : f32
    %15 = vector.broadcast %cst : f32 to vector<72x128xf32>
    %16 = arith.maximumf %14, %15 : vector<72x128xf32>
    %17 = arith.mulf %4, %8 : f32
    %18 = vector.shape_cast %16 : vector<72x128xf32> to vector<1x72x128xf32>
    %cst_6 = arith.constant dense<0.000000e+00> : vector<1xf32>
    %19 = vector.multi_reduction <add>, %18, %cst_6 [1, 2] : vector<1x72x128xf32> to vector<1xf32>
    %20 = vector.shape_cast %19 : vector<1xf32> to vector<1x1x1xf32>
    %21 = vector.extract %20[0, 0, 0] : f32 from vector<1x1x1xf32>
    %22 = arith.mulf %6, %21 : f32
    %23 = arith.addf %17, %22 : f32
    %24 = arith.mulf %5, %9 : f32
    %25 = arith.addf %23, %24 : f32
    %c0_7 = arith.constant 0 : index
    %26 = memref.load %arg2[%c0_7] : memref<3xf32, #tpu.memory_space<smem>>
    memref.store %25, %arg2[%c0_7] : memref<3xf32, #tpu.memory_space<smem>>
    %c6 = arith.constant 6 : index
    %27 = memref.load %arg0[%c6] : memref<18xf32, #tpu.memory_space<smem>>
    %c7 = arith.constant 7 : index
    %28 = memref.load %arg0[%c7] : memref<18xf32, #tpu.memory_space<smem>>
    %c8 = arith.constant 8 : index
    %29 = memref.load %arg0[%c8] : memref<18xf32, #tpu.memory_space<smem>>
    %c9 = arith.constant 9 : index
    %30 = memref.load %arg0[%c9] : memref<18xf32, #tpu.memory_space<smem>>
    %c10 = arith.constant 10 : index
    %31 = memref.load %arg0[%c10] : memref<18xf32, #tpu.memory_space<smem>>
    %c11 = arith.constant 11 : index
    %32 = memref.load %arg0[%c11] : memref<18xf32, #tpu.memory_space<smem>>
    %33 = vector.broadcast %30 : f32 to vector<72x128xf32>
    %34 = arith.mulf %33, %3 : vector<72x128xf32>
    %35 = vector.broadcast %31 : f32 to vector<72x128xf32>
    %36 = arith.mulf %35, %1 : vector<72x128xf32>
    %37 = arith.subf %34, %36 : vector<72x128xf32>
    %cst_8 = arith.constant 0.000000e+00 : f32
    %38 = vector.broadcast %cst_8 : f32 to vector<72x128xf32>
    %39 = arith.maximumf %37, %38 : vector<72x128xf32>
    %40 = arith.mulf %27, %31 : f32
    %41 = vector.shape_cast %39 : vector<72x128xf32> to vector<1x72x128xf32>
    %cst_9 = arith.constant dense<0.000000e+00> : vector<1xf32>
    %42 = vector.multi_reduction <add>, %41, %cst_9 [1, 2] : vector<1x72x128xf32> to vector<1xf32>
    %43 = vector.shape_cast %42 : vector<1xf32> to vector<1x1x1xf32>
    %44 = vector.extract %43[0, 0, 0] : f32 from vector<1x1x1xf32>
    %45 = arith.mulf %29, %44 : f32
    %46 = arith.addf %40, %45 : f32
    %47 = arith.mulf %28, %32 : f32
    %48 = arith.addf %46, %47 : f32
    %c1_10 = arith.constant 1 : index
    %49 = memref.load %arg2[%c1_10] : memref<3xf32, #tpu.memory_space<smem>>
    memref.store %48, %arg2[%c1_10] : memref<3xf32, #tpu.memory_space<smem>>
    %c12 = arith.constant 12 : index
    %50 = memref.load %arg0[%c12] : memref<18xf32, #tpu.memory_space<smem>>
    %c13 = arith.constant 13 : index
    %51 = memref.load %arg0[%c13] : memref<18xf32, #tpu.memory_space<smem>>
    %c14 = arith.constant 14 : index
    %52 = memref.load %arg0[%c14] : memref<18xf32, #tpu.memory_space<smem>>
    %c15 = arith.constant 15 : index
    %53 = memref.load %arg0[%c15] : memref<18xf32, #tpu.memory_space<smem>>
    %c16 = arith.constant 16 : index
    %54 = memref.load %arg0[%c16] : memref<18xf32, #tpu.memory_space<smem>>
    %c17 = arith.constant 17 : index
    %55 = memref.load %arg0[%c17] : memref<18xf32, #tpu.memory_space<smem>>
    %56 = vector.broadcast %53 : f32 to vector<72x128xf32>
    %57 = arith.mulf %56, %3 : vector<72x128xf32>
    %58 = vector.broadcast %54 : f32 to vector<72x128xf32>
    %59 = arith.mulf %58, %1 : vector<72x128xf32>
    %60 = arith.subf %57, %59 : vector<72x128xf32>
    %cst_11 = arith.constant 0.000000e+00 : f32
    %61 = vector.broadcast %cst_11 : f32 to vector<72x128xf32>
    %62 = arith.maximumf %60, %61 : vector<72x128xf32>
    %63 = arith.mulf %50, %54 : f32
    %64 = vector.shape_cast %62 : vector<72x128xf32> to vector<1x72x128xf32>
    %cst_12 = arith.constant dense<0.000000e+00> : vector<1xf32>
    %65 = vector.multi_reduction <add>, %64, %cst_12 [1, 2] : vector<1x72x128xf32> to vector<1xf32>
    %66 = vector.shape_cast %65 : vector<1xf32> to vector<1x1x1xf32>
    %67 = vector.extract %66[0, 0, 0] : f32 from vector<1x1x1xf32>
    %68 = arith.mulf %52, %67 : f32
    %69 = arith.addf %63, %68 : f32
    %70 = arith.mulf %51, %55 : f32
    %71 = arith.addf %69, %70 : f32
    %c2_13 = arith.constant 2 : index
    %72 = memref.load %arg2[%c2_13] : memref<3xf32, #tpu.memory_space<smem>>
    memref.store %71, %arg2[%c2_13] : memref<3xf32, #tpu.memory_space<smem>>
    return
  }
}

</mosaic_0001>

<llo_original>
// kernel: plexplain_totex_batched.1
$region0: #{plexplain_totex_batched.1}
  #allocation0 [shape = 'u32[]', space=smem, size = 0x4, offset = 0x4, fixed_abs, tag = 'smem constant byte address 0x4 - core index']
  #allocation1 [shape = 'u32[72,128]{1,0:T(1,128)}', space=vmem, size = 0x9000, scoped, tag = 'internal scratch']
  %s0 = inlined_call_operand.hbm [shape: f32[18], index: 0, kind: input, shape index: {}]
  %s1 = inlined_call_operand.hbm [shape: f32[2,72,128], index: 1, kind: input, shape index: {}]
  %s2 = inlined_call_operand.hbm [shape: f32[3], index: 2, kind: output, shape index: {}]
  %s3 = sld [smem:[#allocation0]]
  $region26: #{plexplain_totex_batched.1} parent=0
    _
  %s5 = ssub.s32 1, %s3
  %s6 = scalar_select 0, %s5, %s3
  $region1: #{plexplain_totex_batched.1} parent=0
    #allocation2 [shape = 'u8[512]{0}', space=smem, size = 0x200, scoped, tag = 'input window, operand 0, single buffered']
    #allocation3 [shape = 's32[1]{0}', space=sflag, size = 0x4, scoped, tag = 'scoped memory for plexplain_totex_batched.1']
    #allocation4 [shape = 's32[1]{0}', space=sflag, size = 0x4, scoped, tag = 'scoped memory for plexplain_totex_batched.1']
    #allocation5 [shape = 's32[1]{0}', space=sflag, size = 0x4, scoped, tag = 'scoped memory for plexplain_totex_batched.1']
    #allocation6 [shape = 'u8[73728]{0}', space=vmem, size = 0x12000, scoped, tag = 'input window, operand 1, single buffered']
    #allocation7 [shape = 'u8[512]{0}', space=smem, size = 0x200, scoped, tag = 'output window, operand 0, single buffered']
    %7 = vsyncpa [#allocation4], 0
    %8 = vsyncpa [#allocation3], 0
    %9 = vsyncpa [#allocation5], 0
    // Predicated region
    $region2: #{plexplain_totex_batched.1} parent=1 // pred_check
      _
    $region3: #{plexplain_totex_batched.1} parent=1 // pred_check_branch
      %11 = sbr.rel (0) target = $region5
    $region4: #{plexplain_totex_batched.1} parent=1 // pred_region
      %13 = vsyncadd [#allocation4], 0
      %s15 = sshll.u32 %s0, 4
      %s16 = int_to_ptr.hbm [resolvable:$true] %s15
      %18 = dma.hbm_to_smem %s16, 16, [#allocation2], [#allocation4]
    $region5: #{plexplain_totex_batched.1} parent=1 // pred_fallthru
      _
    // Predicated region
    $region6: #{plexplain_totex_batched.1} parent=1 // pred_check
      _
    $region7: #{plexplain_totex_batched.1} parent=1 // pred_check_branch
      %20 = sbr.rel (0) target = $region9
    $region8: #{plexplain_totex_batched.1} parent=1 // pred_region
      %22 = vsyncadd [#allocation3], 0
      %s23 = sshll.u32 %s1, 4
      %s24 = int_to_ptr.hbm [resolvable:$true] %s23
      %s25 = sshll.u32 [#allocation6], 4
      %s26 = int_to_ptr.vmem [resolvable:$true] %s25
      %31 = dma.hbm_to_vmem [thread:$0]  %s24, 2304, %s26, [#allocation3], 128, 128, 8
    $region9: #{plexplain_totex_batched.1} parent=1 // pred_fallthru
      _
    // Predicated region
    $region10: #{plexplain_totex_batched.1} parent=1 // pred_check
      _
    $region11: #{plexplain_totex_batched.1} parent=1 // pred_check_branch
      %33 = sbr.rel (0) target = $region13
    $region12: #{plexplain_totex_batched.1} parent=1 // pred_region
      %35 = dma.done [#allocation4], 16
    $region13: #{plexplain_totex_batched.1} parent=1 // pred_fallthru
      _
    // Predicated region
    $region14: #{plexplain_totex_batched.1} parent=1 // pred_check
      _
    $region15: #{plexplain_totex_batched.1} parent=1 // pred_check_branch
      %37 = sbr.rel (0) target = $region17
    $region16: #{plexplain_totex_batched.1} parent=1 // pred_region
      %39 = dma.done [#allocation3], 2304
    $region17: #{plexplain_totex_batched.1} parent=1 // pred_fallthru
      _
    %40 = sfence
    %v41 = vld [vmem:[#allocation6] sm:$0xff]
    %v42 = vld [vmem:[#allocation6 + $0x8] sm:$0xff]
    %v43 = vld [vmem:[#allocation6 + $0x10] sm:$0xff]
    %v44 = vld [vmem:[#allocation6 + $0x18] sm:$0xff]
    %v45 = vld [vmem:[#allocation6 + $0x20] sm:$0xff]
    %v46 = vld [vmem:[#allocation6 + $0x28] sm:$0xff]
    %v47 = vld [vmem:[#allocation6 + $0x30] sm:$0xff]
    %v48 = vld [vmem:[#allocation6 + $0x38] sm:$0xff]
    %v49 = vld [vmem:[#allocation6 + $0x40] sm:$0xff]
    %s50 = scalar_lea.vmem [#allocation6], 72
    %v51 = vld [vmem:[%s50] sm:$0xff]
    %v52 = vld [vmem:[%s50 + $0x8] sm:$0xff]
    %v53 = vld [vmem:[%s50 + $0x10] sm:$0xff]
    %v54 = vld [vmem:[%s50 + $0x18] sm:$0xff]
    %v55 = vld [vmem:[%s50 + $0x20] sm:$0xff]
    %v56 = vld [vmem:[%s50 + $0x28] sm:$0xff]
    %v57 = vld [vmem:[%s50 + $0x30] sm:$0xff]
    %v58 = vld [vmem:[%s50 + $0x38] sm:$0xff]
    %v59 = vld [vmem:[%s50 + $0x40] sm:$0xff]
    %s60 = sld [smem:[#allocation2]]
    %s61 = sld [smem:[#allocation2 + $0x1]]
    %s62 = sld [smem:[#allocation2 + $0x2]]
    %s63 = sld [smem:[#allocation2 + $0x3]]
    %s64 = sld [smem:[#allocation2 + $0x4]]
    %s65 = sld [smem:[#allocation2 + $0x5]]
    %v66 = vstv %s63
    %v67 = vmul.f32 %v66, %v51
    %v68 = vmul.f32 %v66, %v52
    %v69 = vmul.f32 %v66, %v53
    %v70 = vmul.f32 %v66, %v54
    %v71 = vmul.f32 %v66, %v55
    %v72 = vmul.f32 %v66, %v56
    %v73 = vmul.f32 %v66, %v57
    %v74 = vmul.f32 %v66, %v58
    %v75 = vmul.f32 %v66, %v59
    %v76 = vstv %s64
    %v77 = vmul.f32 %v76, %v41
    %v78 = vmul.f32 %v76, %v42
    %v79 = vmul.f32 %v76, %v43
    %v80 = vmul.f32 %v76, %v44
    %v81 = vmul.f32 %v76, %v45
    %v82 = vmul.f32 %v76, %v46
    %v83 = vmul.f32 %v76, %v47
    %v84 = vmul.f32 %v76, %v48
    %v85 = vmul.f32 %v76, %v49
    %v86 = vsub.f32 %v67, %v77
    %v87 = vsub.f32 %v68, %v78
    %v88 = vsub.f32 %v69, %v79
    %v89 = vsub.f32 %v70, %v80
    %v90 = vsub.f32 %v71, %v81
    %v91 = vsub.f32 %v72, %v82
    %v92 = vsub.f32 %v73, %v83
    %v93 = vsub.f32 %v74, %v84
    %v94 = vsub.f32 %v75, %v85
    %v95 = vmax.f32 %v86, 0.0
    %v96 = vmax.f32 %v87, 0.0
    %v97 = vmax.f32 %v88, 0.0
    %v98 = vmax.f32 %v89, 0.0
    %v99 = vmax.f32 %v90, 0.0
    %v100 = vmax.f32 %v91, 0.0
    %v101 = vmax.f32 %v92, 0.0
    %v102 = vmax.f32 %v93, 0.0
    %v103 = vmax.f32 %v94, 0.0
    %s104 = smul.f32 %s60, %s64
    %v105 = vadd.f32 %v95, %v96
    %v106 = vadd.f32 %v105, %v97
    %v107 = vadd.f32 %v106, %v98
    %v108 = vadd.f32 %v107, %v99
    %v109 = vadd.f32 %v108, %v100
    %v110 = vadd.f32 %v109, %v101
    %v111 = vadd.f32 %v110, %v102
    %v112 = vadd.f32 %v111, %v103
    %113 = vadd.xlane.f32.xlu0 %v112
    %v114 = vpop.xlane.xlu0 %113
    %v115 = vrot.slane %v114, 4
    %v116 = vadd.f32 %v114, %v115
    %v117 = vrot.slane %v116, 2
    %v118 = vadd.f32 %v116, %v117
    %v119 = vrot.slane %v118, 1
    %v120 = vadd.f32 %v118, %v119
    %s121 = vtos %v120
    %s122 = smul.f32 %s62, %s121
    %s123 = sadd.f32 %s104, %s122
    %s124 = smul.f32 %s61, %s65
    %s125 = sadd.f32 %s123, %s124
    %s126 = scalar_lea.smem [#allocation7], 0
    %127 = sst [smem:[%s126]] %s125
    %s128 = sld [smem:[#allocation2 + $0x6]]
    %s129 = sld [smem:[#allocation2 + $0x7]]
    %s130 = sld [smem:[#allocation2 + $0x8]]
    %s131 = sld [smem:[#allocation2 + $0x9]]
    %s132 = sld [smem:[#allocation2 + $0xa]]
    %s133 = sld [smem:[#allocation2 + $0xb]]
    %v134 = vstv %s131
    %v135 = vmul.f32 %v134, %v51
    %v136 = vmul.f32 %v134, %v52
    %v137 = vmul.f32 %v134, %v53
    %v138 = vmul.f32 %v134, %v54
    %v139 = vmul.f32 %v134, %v55
    %v140 = vmul.f32 %v134, %v56
    %v141 = vmul.f32 %v134, %v57
    %v142 = vmul.f32 %v134, %v58
    %v143 = vmul.f32 %v134, %v59
    %v144 = vstv %s132
    %v145 = vmul.f32 %v144, %v41
    %v146 = vmul.f32 %v144, %v42
    %v147 = vmul.f32 %v144, %v43
    %v148 = vmul.f32 %v144, %v44
    %v149 = vmul.f32 %v144, %v45
    %v150 = vmul.f32 %v144, %v46
    %v151 = vmul.f32 %v144, %v47
    %v152 = vmul.f32 %v144, %v48
    %v153 = vmul.f32 %v144, %v49
    %v154 = vsub.f32 %v135, %v145
    %v155 = vsub.f32 %v136, %v146
    %v156 = vsub.f32 %v137, %v147
    %v157 = vsub.f32 %v138, %v148
    %v158 = vsub.f32 %v139, %v149
    %v159 = vsub.f32 %v140, %v150
    %v160 = vsub.f32 %v141, %v151
    %v161 = vsub.f32 %v142, %v152
    %v162 = vsub.f32 %v143, %v153
    %v163 = vmax.f32 %v154, 0.0
    %v164 = vmax.f32 %v155, 0.0
    %v165 = vmax.f32 %v156, 0.0
    %v166 = vmax.f32 %v157, 0.0
    %v167 = vmax.f32 %v158, 0.0
    %v168 = vmax.f32 %v159, 0.0
    %v169 = vmax.f32 %v160, 0.0
    %v170 = vmax.f32 %v161, 0.0
    %v171 = vmax.f32 %v162, 0.0
    %s172 = smul.f32 %s128, %s132
    %v173 = vadd.f32 %v163, %v164
    %v174 = vadd.f32 %v173, %v165
    %v175 = vadd.f32 %v174, %v166
    %v176 = vadd.f32 %v175, %v167
    %v177 = vadd.f32 %v176, %v168
    %v178 = vadd.f32 %v177, %v169
    %v179 = vadd.f32 %v178, %v170
    %v180 = vadd.f32 %v179, %v171
    %181 = vadd.xlane.f32.xlu0 %v180
    %v182 = vpop.xlane.xlu0 %181
    %v183 = vrot.slane %v182, 4
    %v184 = vadd.f32 %v182, %v183
    %v185 = vrot.slane %v184, 2
    %v186 = vadd.f32 %v184, %v185
    %v187 = vrot.slane %v186, 1
    %v188 = vadd.f32 %v186, %v187
    %s189 = vtos %v188
    %s190 = smul.f32 %s130, %s189
    %s191 = sadd.f32 %s172, %s190
    %s192 = smul.f32 %s129, %s133
    %s193 = sadd.f32 %s191, %s192
    %s194 = scalar_lea.smem [#allocation7], 1
    %195 = sst [smem:[%s194]] %s193
    %s196 = sld [smem:[#allocation2 + $0xc]]
    %s197 = sld [smem:[#allocation2 + $0xd]]
    %s198 = sld [smem:[#allocation2 + $0xe]]
    %s199 = sld [smem:[#allocation2 + $0xf]]
    %s200 = sld [smem:[#allocation2 + $0x10]]
    %s201 = sld [smem:[#allocation2 + $0x11]]
    %v202 = vstv %s199
    %v203 = vmul.f32 %v202, %v51
    %v204 = vmul.f32 %v202, %v52
    %v205 = vmul.f32 %v202, %v53
    %v206 = vmul.f32 %v202, %v54
    %v207 = vmul.f32 %v202, %v55
    %v208 = vmul.f32 %v202, %v56
    %v209 = vmul.f32 %v202, %v57
    %v210 = vmul.f32 %v202, %v58
    %v211 = vmul.f32 %v202, %v59
    %v212 = vstv %s200
    %v213 = vmul.f32 %v212, %v41
    %v214 = vmul.f32 %v212, %v42
    %v215 = vmul.f32 %v212, %v43
    %v216 = vmul.f32 %v212, %v44
    %v217 = vmul.f32 %v212, %v45
    %v218 = vmul.f32 %v212, %v46
    %v219 = vmul.f32 %v212, %v47
    %v220 = vmul.f32 %v212, %v48
    %v221 = vmul.f32 %v212, %v49
    %v222 = vsub.f32 %v203, %v213
    %v223 = vsub.f32 %v204, %v214
    %v224 = vsub.f32 %v205, %v215
    %v225 = vsub.f32 %v206, %v216
    %v226 = vsub.f32 %v207, %v217
    %v227 = vsub.f32 %v208, %v218
    %v228 = vsub.f32 %v209, %v219
    %v229 = vsub.f32 %v210, %v220
    %v230 = vsub.f32 %v211, %v221
    %v231 = vmax.f32 %v222, 0.0
    %v232 = vmax.f32 %v223, 0.0
    %v233 = vmax.f32 %v224, 0.0
    %v234 = vmax.f32 %v225, 0.0
    %v235 = vmax.f32 %v226, 0.0
    %v236 = vmax.f32 %v227, 0.0
    %v237 = vmax.f32 %v228, 0.0
    %v238 = vmax.f32 %v229, 0.0
    %v239 = vmax.f32 %v230, 0.0
    %s240 = smul.f32 %s196, %s200
    %v241 = vadd.f32 %v231, %v232
    %v242 = vadd.f32 %v241, %v233
    %v243 = vadd.f32 %v242, %v234
    %v244 = vadd.f32 %v243, %v235
    %v245 = vadd.f32 %v244, %v236
    %v246 = vadd.f32 %v245, %v237
    %v247 = vadd.f32 %v246, %v238
    %v248 = vadd.f32 %v247, %v239
    %249 = vadd.xlane.f32.xlu0 %v248
    %v250 = vpop.xlane.xlu0 %249
    %v251 = vrot.slane %v250, 4
    %v252 = vadd.f32 %v250, %v251
    %v253 = vrot.slane %v252, 2
    %v254 = vadd.f32 %v252, %v253
    %v255 = vrot.slane %v254, 1
    %v256 = vadd.f32 %v254, %v255
    %s257 = vtos %v256
    %s258 = smul.f32 %s198, %s257
    %s259 = sadd.f32 %s240, %s258
    %s260 = smul.f32 %s197, %s201
    %s261 = sadd.f32 %s259, %s260
    %s262 = scalar_lea.smem [#allocation7], 2
    %263 = sst [smem:[%s262]] %s261
    // Predicated region
    $region18: #{plexplain_totex_batched.1} parent=1 // pred_check
      _
    $region19: #{plexplain_totex_batched.1} parent=1 // pred_check_branch
      %265 = sbr.rel (0) target = $region21
    $region20: #{plexplain_totex_batched.1} parent=1 // pred_region
      %267 = vsyncadd [#allocation5], 0
      %s269 = sshll.u32 %s2, 4
      %s270 = int_to_ptr.hbm [resolvable:$true] %s269
      %272 = dma.smem_to_hbm [#allocation7], 16, %s270, [#allocation5]
    $region21: #{plexplain_totex_batched.1} parent=1 // pred_fallthru
      _
    // Predicated region
    $region22: #{plexplain_totex_batched.1} parent=1 // pred_check
      _
    $region23: #{plexplain_totex_batched.1} parent=1 // pred_check_branch
      %274 = sbr.rel (0) target = $region25
    $region24: #{plexplain_totex_batched.1} parent=1 // pred_region
      %276 = dma.done [#allocation5], 16
    $region25: #{plexplain_totex_batched.1} parent=1 // pred_fallthru
      _
    %277 = sfence
    %278 = vsyncpa [#allocation3], 1
    %279 = vsyncpa [#allocation4], 1
    %280 = vsyncpa [#allocation5], 1

</llo_original>
